<compile_context>
chip_gen: v5e
topology: v5e:2x2
jax: 0.10.0
libtpu: 0.0.40
codegen_flags: <defaults>
</compile_context>

<pallas_src>
import jax
import jax.numpy as jnp
from jax.experimental import pallas as pl
from jax.experimental.pallas import tpu as pltpu  # noqa: F401  (TPU backend)


def _linear_kernel(x_ref, waug_ref, o_ref):
    # x_ref   : (B, IN)        in VMEM
    # waug_ref: (IN + 1, OUT)  in VMEM  -- rows 0..IN-1 = W.T, row IN = bias
    # o_ref   : (B, OUT)       in VMEM
    B, IN = x_ref.shape
    OUT = o_ref.shape[1]

    x = x_ref[...].astype(jnp.float32)
    w = waug_ref[...].astype(jnp.float32)

    # Bias row as the initial accumulator, broadcast across the batch sublanes.
    acc = jnp.broadcast_to(w[IN:IN + 1, :], (B, OUT))

    # K = IN = 4: statically unrolled VPU FMAs (no MXU pass for a tiny K).
    for k in range(IN):
        acc = acc + x[:, k:k + 1] * w[k:k + 1, :]

    o_ref[...] = acc.astype(o_ref.dtype)


def make_linear_pallas(B, IN, OUT, dtype=jnp.float32):
    """Build a jitted y = x @ W.T + b where parameters arrive pre-augmented
    as waug = concat([W.T, b[None, :]], axis=0) of shape (IN+1, OUT)."""
    cost = pl.CostEstimate(
        flops=2 * B * IN * OUT,
        transcendentals=0,
        bytes_accessed=(B * IN + (IN + 1) * OUT + B * OUT) * 4,
    )
    fn = pl.pallas_call(
        _linear_kernel,
        out_shape=jax.ShapeDtypeStruct((B, OUT), dtype),
        in_specs=[
            pl.BlockSpec((B, IN), lambda: (0, 0)),
            pl.BlockSpec((IN + 1, OUT), lambda: (0, 0)),
        ],
        out_specs=pl.BlockSpec((B, OUT), lambda: (0, 0)),
        cost_estimate=cost,
    )
    return jax.jit(fn)


if __name__ == "__main__":
    key = jax.random.PRNGKey(0)
    k_x, k_w, k_b = jax.random.split(key, 3)

    B, IN, OUT = 2, 4, 5

    # Deterministic parameter init (synthetic, not a checkpoint load).
    # Roughly matches nn.Linear's uniform(-1/sqrt(IN), 1/sqrt(IN)) scale.
    bound = 1.0 / (IN ** 0.5)
    x = jax.random.normal(k_x, (B, IN), dtype=jnp.float32)
    weight = jax.random.uniform(k_w, (OUT, IN), dtype=jnp.float32,
                                minval=-bound, maxval=bound)
    bias = jax.random.uniform(k_b, (OUT,), dtype=jnp.float32,
                              minval=-bound, maxval=bound)

    # One-time parameter preparation (init-time, NOT per-call glue):
    # rows 0..IN-1 hold W.T, row IN holds the bias.
    waug = jnp.concatenate([weight.T, bias[None, :]], axis=0)  # (IN+1, OUT)

    linear = make_linear_pallas(B, IN, OUT)
    y = linear(x, waug)
    jax.block_until_ready(y)

    # Correctness check against the plain-JAX reference (nn.Linear semantics).
    y_ref = x @ weight.T + bias
    assert y.shape == (B, OUT)
    assert jnp.allclose(y, y_ref, atol=1e-5, rtol=1e-5)

    print("KERNEL_OK")
</pallas_src>

<mosaic_0001>
module attributes {stable_mosaic.version = 11 : i64} {
  func.func @_linear_kernel(%arg0: memref<2x4xf32, #tpu.memory_space<vmem>>, %arg1: memref<5x5xf32, #tpu.memory_space<vmem>>, %arg2: memref<2x5xf32, #tpu.memory_space<vmem>>) attributes {dimension_semantics = [], scalar_prefetch = 0 : i64, scratch_operands = 0 : i64, tpu.core_type = #tpu.core_type<tc>} {
    %c0 = arith.constant 0 : index
    %c0_0 = arith.constant 0 : index
    %0 = vector.load %arg0[%c0, %c0_0] : memref<2x4xf32, #tpu.memory_space<vmem>>, vector<2x4xf32>
    %c0_1 = arith.constant 0 : index
    %c0_2 = arith.constant 0 : index
    %1 = vector.load %arg1[%c0_1, %c0_2] : memref<5x5xf32, #tpu.memory_space<vmem>>, vector<5x5xf32>
    %2 = vector.extract_strided_slice %1 {offsets = [4, 0], sizes = [1, 5], strides = [1, 1]} : vector<5x5xf32> to vector<1x5xf32>
    %3 = vector.shape_cast %2 : vector<1x5xf32> to vector<1x5xf32>
    %4 = vector.broadcast %3 : vector<1x5xf32> to vector<2x5xf32>
    %5 = vector.extract_strided_slice %0 {offsets = [0, 0], sizes = [2, 1], strides = [1, 1]} : vector<2x4xf32> to vector<2x1xf32>
    %6 = vector.extract_strided_slice %1 {offsets = [0, 0], sizes = [1, 5], strides = [1, 1]} : vector<5x5xf32> to vector<1x5xf32>
    %7 = vector.broadcast %5 : vector<2x1xf32> to vector<2x5xf32>
    %8 = vector.broadcast %6 : vector<1x5xf32> to vector<2x5xf32>
    %9 = arith.mulf %7, %8 : vector<2x5xf32>
    %10 = arith.addf %4, %9 : vector<2x5xf32>
    %11 = vector.extract_strided_slice %0 {offsets = [0, 1], sizes = [2, 1], strides = [1, 1]} : vector<2x4xf32> to vector<2x1xf32>
    %12 = vector.extract_strided_slice %1 {offsets = [1, 0], sizes = [1, 5], strides = [1, 1]} : vector<5x5xf32> to vector<1x5xf32>
    %13 = vector.broadcast %11 : vector<2x1xf32> to vector<2x5xf32>
    %14 = vector.broadcast %12 : vector<1x5xf32> to vector<2x5xf32>
    %15 = arith.mulf %13, %14 : vector<2x5xf32>
    %16 = arith.addf %10, %15 : vector<2x5xf32>
    %17 = vector.extract_strided_slice %0 {offsets = [0, 2], sizes = [2, 1], strides = [1, 1]} : vector<2x4xf32> to vector<2x1xf32>
    %18 = vector.extract_strided_slice %1 {offsets = [2, 0], sizes = [1, 5], strides = [1, 1]} : vector<5x5xf32> to vector<1x5xf32>
    %19 = vector.broadcast %17 : vector<2x1xf32> to vector<2x5xf32>
    %20 = vector.broadcast %18 : vector<1x5xf32> to vector<2x5xf32>
    %21 = arith.mulf %19, %20 : vector<2x5xf32>
    %22 = arith.addf %16, %21 : vector<2x5xf32>
    %23 = vector.extract_strided_slice %0 {offsets = [0, 3], sizes = [2, 1], strides = [1, 1]} : vector<2x4xf32> to vector<2x1xf32>
    %24 = vector.extract_strided_slice %1 {offsets = [3, 0], sizes = [1, 5], strides = [1, 1]} : vector<5x5xf32> to vector<1x5xf32>
    %25 = vector.broadcast %23 : vector<2x1xf32> to vector<2x5xf32>
    %26 = vector.broadcast %24 : vector<1x5xf32> to vector<2x5xf32>
    %27 = arith.mulf %25, %26 : vector<2x5xf32>
    %28 = arith.addf %22, %27 : vector<2x5xf32>
    %c0_3 = arith.constant 0 : index
    %c0_4 = arith.constant 0 : index
    %29 = vector.load %arg2[%c0_3, %c0_4] : memref<2x5xf32, #tpu.memory_space<vmem>>, vector<2x5xf32>
    tpu.vector_store %arg2[%c0_3, %c0_4], %28 {strides = array<i32>} : memref<2x5xf32, #tpu.memory_space<vmem>>, vector<2x5xf32>,
    return
  }
}

</mosaic_0001>

<llo_original>
// kernel: tpu_custom_call.1
$region0: #{tpu_custom_call.1}
  #allocation0 [shape = 'u32[]', space=smem, size = 0x4, offset = 0x4, fixed_abs, tag = 'smem constant byte address 0x4 - core index']
  #allocation1 [shape = 'u32[72,128]{1,0:T(1,128)}', space=vmem, size = 0x9000, scoped, tag = 'internal scratch']
  %s0 = inlined_call_operand.hbm [shape: f32[2,4], index: 0, kind: input, shape index: {}]
  %s1 = inlined_call_operand.hbm [shape: f32[5,5], index: 1, kind: input, shape index: {}]
  %s2 = inlined_call_operand.hbm [shape: f32[2,5], index: 2, kind: output, shape index: {}]
  %s3 = sld [smem:[#allocation0]]
  $region26: #{tpu_custom_call.1} parent=0
    _
  %s5 = ssub.s32 1, %s3
  %s6 = scalar_select 0, %s5, %s3
  $region1: #{tpu_custom_call.1} parent=0
    #allocation2 [shape = 'u8[1024]{0}', space=vmem, size = 0x400, scoped, tag = 'input window, operand 0, single buffered']
    #allocation3 [shape = 's32[1]{0}', space=sflag, size = 0x4, scoped, tag = 'scoped memory for tpu_custom_call.1']
    #allocation4 [shape = 's32[1]{0}', space=sflag, size = 0x4, scoped, tag = 'scoped memory for tpu_custom_call.1']
    #allocation5 [shape = 'u8[4096]{0}', space=vmem, size = 0x1000, scoped, tag = 'input window, operand 1, single buffered']
    #allocation6 [shape = 's32[1]{0}', space=sflag, size = 0x4, scoped, tag = 'scoped memory for tpu_custom_call.1']
    #allocation7 [shape = 'u8[1024]{0}', space=vmem, size = 0x400, scoped, tag = 'output window, operand 0, single buffered']
    %7 = vsyncpa [#allocation3], 0
    %8 = vsyncpa [#allocation6], 0
    %9 = vsyncpa [#allocation4], 0
    // Predicated region
    $region2: #{tpu_custom_call.1} parent=1 // pred_check
      _
    $region3: #{tpu_custom_call.1} parent=1 // pred_check_branch
      %11 = sbr.rel (0) target = $region5
    $region4: #{tpu_custom_call.1} parent=1 // pred_region
      %13 = vsyncadd [#allocation3], 0
      %s15 = sshll.u32 %s0, 4
      %s16 = int_to_ptr.hbm [resolvable:$true] %s15
      %s17 = sshll.u32 [#allocation2], 4
      %s18 = int_to_ptr.vmem [resolvable:$true] %s17
      %20 = dma.hbm_to_vmem [thread:$0]  %s16, 32, %s18, [#allocation3]
    $region5: #{tpu_custom_call.1} parent=1 // pred_fallthru
      _
    // Predicated region
    $region6: #{tpu_custom_call.1} parent=1 // pred_check
      _
    $region7: #{tpu_custom_call.1} parent=1 // pred_check_branch
      %22 = sbr.rel (0) target = $region9
    $region8: #{tpu_custom_call.1} parent=1 // pred_region
      %24 = vsyncadd [#allocation6], 0
      %s26 = sshll.u32 %s1, 4
      %s27 = int_to_ptr.hbm [resolvable:$true] %s26
      %s28 = sshll.u32 [#allocation5], 4
      %s29 = int_to_ptr.vmem [resolvable:$true] %s28
      %31 = dma.hbm_to_vmem [thread:$0]  %s27, 128, %s29, [#allocation6]
    $region9: #{tpu_custom_call.1} parent=1 // pred_fallthru
      _
    // Predicated region
    $region10: #{tpu_custom_call.1} parent=1 // pred_check
      _
    $region11: #{tpu_custom_call.1} parent=1 // pred_check_branch
      %33 = sbr.rel (0) target = $region13
    $region12: #{tpu_custom_call.1} parent=1 // pred_region
      %35 = dma.done [#allocation3], 32
    $region13: #{tpu_custom_call.1} parent=1 // pred_fallthru
      _
    // Predicated region
    $region14: #{tpu_custom_call.1} parent=1 // pred_check
      _
    $region15: #{tpu_custom_call.1} parent=1 // pred_check_branch
      %37 = sbr.rel (0) target = $region17
    $region16: #{tpu_custom_call.1} parent=1 // pred_region
      %39 = dma.done [#allocation6], 128
    $region17: #{tpu_custom_call.1} parent=1 // pred_fallthru
      _
    %v40 = vld [vmem:[#allocation2] sm:$0x3]
    %v41 = vld [vmem:[#allocation5] sm:$0x1f]
    %v42 = vperm.slane %v41, 4
    %44 = vset.pattern.permute.xlu0 0
    %45 = vperm.xlu0 %44, %v40
    %v46 = vpop.permute.xlu0 %45
    %v48 = vperm.slane %v41, 0
    %v49 = vmul.f32 %v46, %v48
    %v50 = vadd.f32 %v42, %v49
    %51 = vset.pattern.permute.xlu0 1
    %52 = vperm.xlu0 %51, %v40
    %v53 = vpop.permute.xlu0 %52
    %v55 = vperm.slane %v41, 1
    %v56 = vmul.f32 %v53, %v55
    %v57 = vadd.f32 %v50, %v56
    %58 = vset.pattern.permute.xlu0 2
    %59 = vperm.xlu0 %58, %v40
    %v60 = vpop.permute.xlu0 %59
    %v62 = vperm.slane %v41, 2
    %v63 = vmul.f32 %v60, %v62
    %v64 = vadd.f32 %v57, %v63
    %65 = vset.pattern.permute.xlu0 3
    %66 = vperm.xlu0 %65, %v40
    %v67 = vpop.permute.xlu0 %66
    %v69 = vperm.slane %v41, 3
    %v70 = vmul.f32 %v67, %v69
    %v71 = vadd.f32 %v64, %v70
    %vm72 = vcmask 33792
    %73 = vst.msk [vmem:[#allocation7] sm:$0x3] %vm72, %v71
    // Predicated region
    $region18: #{tpu_custom_call.1} parent=1 // pred_check
      _
    $region19: #{tpu_custom_call.1} parent=1 // pred_check_branch
      %75 = sbr.rel (0) target = $region21
    $region20: #{tpu_custom_call.1} parent=1 // pred_region
      %77 = vsyncadd [#allocation4], 0
      %s79 = sshll.u32 [#allocation7], 4
      %s80 = int_to_ptr.vmem [resolvable:$true] %s79
      %s81 = sshll.u32 %s2, 4
      %s82 = int_to_ptr.hbm [resolvable:$true] %s81
      %84 = dma.vmem_to_hbm [thread:$0]  %s80, 32, %s82, [#allocation4]
    $region21: #{tpu_custom_call.1} parent=1 // pred_fallthru
      _
    // Predicated region
    $region22: #{tpu_custom_call.1} parent=1 // pred_check
      _
    $region23: #{tpu_custom_call.1} parent=1 // pred_check_branch
      %86 = sbr.rel (0) target = $region25
    $region24: #{tpu_custom_call.1} parent=1 // pred_region
      %88 = dma.done [#allocation4], 32
    $region25: #{tpu_custom_call.1} parent=1 // pred_fallthru
      _
    %89 = vsyncpa [#allocation3], 1
    %90 = vsyncpa [#allocation6], 1
    %91 = vsyncpa [#allocation4], 1

</llo_original>
